<compile_context>
chip_gen: v7x
topology: tpu7x:2x2x1
jax: 0.10.0
libtpu: 0.0.40
codegen_flags: <defaults>
</compile_context>

<pallas_src>
import math

import jax
import jax.numpy as jnp
import numpy as np
from jax.experimental import pallas as pl
from jax.experimental.pallas import tpu as pltpu


def _conv_bn_pool_kernel(x_ref, r_ref, s_ref, p_ref, o_ref):
    # x_ref : (H, W)            f32 VMEM -- input plane (leading 1x1 squeezed)
    # r_ref : (Hp_pad, H)       f32 VMEM -- row decimation selector  R[p, 2p] = 1
    # s_ref : (W, Wp_pad)       f32 VMEM -- col decimation selector  S[2q, q] = 1
    # p_ref : (7,)              f32 SMEM -- [w00, w01, w10, w11, gamma, beta, eps]
    # o_ref : (Hp_pad, Wp_pad)  f32 VMEM -- padded pooled output (32, 128)
    x = x_ref[...]
    H, W = x.shape

    w00 = p_ref[0]
    w01 = p_ref[1]
    w10 = p_ref[2]
    w11 = p_ref[3]
    gamma = p_ref[4]
    beta = p_ref[5]
    eps = p_ref[6]

    # Max-pool commutes with the BN affine only when a = gamma*rsqrt(var+eps)
    # >= 0.  Fold sign(gamma) into the conv weights (scalar ops only): max-
    # pooling sgn*y gives the min-pool path when gamma < 0 and the sign is
    # undone in the final affine.  The conv bias is omitted: it shifts y and
    # its batch mean identically, so it cancels in training-mode BatchNorm.
    sgn = jnp.where(gamma >= 0.0, 1.0, -1.0).astype(jnp.float32)
    w00s = w00 * sgn
    w01s = w01 * sgn
    w10s = w10 * sgn
    w11s = w11 * sgn

    # --- 2x2 valid convolution: ys = sgn * conv(x, w)  (XLU rolls + VPU MACs)
    x01 = pltpu.roll(x, W - 1, 1)            # x[i, j+1]     (lane rotate)
    t = w00s * x + w01s * x01                # top-row taps
    u = w10s * x + w11s * x01                # bottom-row taps
    ys = t + pltpu.roll(u, H - 1, 0)         # + u[i+1, j]   (sublane rotate)
    # ys is valid on rows [0, H-2] and cols [0, W-2]; wrapped edges are finite.

    # --- BatchNorm batch statistics, one pass --------------------------------
    # Row collapse of ys and ys*ys via two independent, back-to-back MXU dots
    # against a single-row row mask; the lane (column) mask is applied on the
    # 1-vreg results and finished with an XLU cross-lane reduce.
    sub8 = jax.lax.broadcasted_iota(jnp.int32, (8, H), 0)
    lanH = jax.lax.broadcasted_iota(jnp.int32, (8, H), 1)
    rmask = ((sub8 == 0) & (lanH < (H - 1))).astype(jnp.float32)     # (8, H)
    lanW = jax.lax.broadcasted_iota(jnp.int32, (8, W), 1)
    cmask = (lanW < (W - 1)).astype(jnp.float32)                     # (8, W)

    csum_y = jnp.dot(rmask, ys, preferred_element_type=jnp.float32)        # (8, W)
    csum_yy = jnp.dot(rmask, ys * ys, preferred_element_type=jnp.float32)  # (8, W)
    inv_count = 1.0 / float((H - 1) * (W - 1))
    s1 = jnp.sum(csum_y * cmask, keepdims=True)[0, 0]     # sum over valid cells
    s2 = jnp.sum(csum_yy * cmask, keepdims=True)[0, 0]
    mean = sgn * s1 * inv_count                  # mean of y (not of sgn*y)
    var = s2 * inv_count - mean * mean           # biased var (PyTorch train BN)
    a = gamma * jax.lax.rsqrt(var + eps)

    # --- MaxPool2d(2, stride=2) on raw ys + stride-2 decimation on the MXU ---
    # Independent of the stats chain above, so this work overlaps the stat dots.
    pc = jnp.maximum(ys, pltpu.roll(ys, W - 1, 1))    # max over column pairs
    pm = jnp.maximum(pc, pltpu.roll(pc, H - 1, 0))    # max over row pairs
    pooled = jnp.dot(jnp.dot(r_ref[...], pm, preferred_element_type=jnp.float32),
                     s_ref[...], preferred_element_type=jnp.float32)  # (Hp_pad, Wp_pad)
    # pooled[p, q] = pm[2p, 2q]; rows/cols beyond the valid (31, 63) window are
    # finite junk or zeros and are sliced away by the wrapper.

    # --- BN affine folded to 2 ops on the small pooled block -----------------
    # maxpool((y - mean)*a + beta) == maxpool(sgn*y) * (sgn*a) + (beta - mean*a)
    o_ref[...] = pooled * (sgn * a) + (beta - mean * a)


def conv_bn_pool(x_nchw, w, b, gamma, beta, eps=1e-5):
    # x_nchw: (1, 1, H, W) float32.  Training-mode BatchNorm (batch statistics),
    # matching the reference module's forward; the conv bias cancels under
    # these statistics and is dropped.  If running-stat (eval-mode) BN were
    # required, the bias would have to be re-added.
    # TODO(synk): running_mean / running_var buffer updates (training-time side
    # effect of BatchNorm2d) are not produced; only the forward output is.
    del b
    _, _, H, W = x_nchw.shape
    Hc, Wc = H - 1, W - 1               # conv output spatial dims
    Hp, Wp = Hc // 2, Wc // 2           # pooled output spatial dims
    Hp_pad = ((Hp + 7) // 8) * 8        # sublane-aligned rows   (32)
    Wp_pad = ((Wp + 127) // 128) * 128  # lane-dense columns     (128)

    # Trace-time constant stride-2 decimation selectors; their DMA overlaps the
    # input DMA and no VPU construction happens in the kernel body.
    pr = np.arange(Hp_pad)
    pr = pr[2 * pr < H]
    R = np.zeros((Hp_pad, H), np.float32)
    R[pr, 2 * pr] = 1.0
    qc = np.arange(Wp_pad)
    qc = qc[2 * qc < W]
    S = np.zeros((W, Wp_pad), np.float32)
    S[2 * qc, qc] = 1.0

    params = jnp.stack([
        jnp.asarray(w[0, 0], jnp.float32),
        jnp.asarray(w[0, 1], jnp.float32),
        jnp.asarray(w[1, 0], jnp.float32),
        jnp.asarray(w[1, 1], jnp.float32),
        jnp.asarray(gamma, jnp.float32),
        jnp.asarray(beta, jnp.float32),
        jnp.asarray(eps, jnp.float32),
    ])

    out_pad = pl.pallas_call(
        _conv_bn_pool_kernel,
        grid=(1,),
        out_shape=jax.ShapeDtypeStruct((1, 1, Hp_pad, Wp_pad), jnp.float32),
        in_specs=[
            pl.BlockSpec((None, None, H, W), lambda i: (0, 0, 0, 0)),  # x plane
            pl.BlockSpec(memory_space=pltpu.MemorySpace.VMEM),         # R const
            pl.BlockSpec(memory_space=pltpu.MemorySpace.VMEM),         # S const
            pl.BlockSpec(memory_space=pltpu.MemorySpace.SMEM),         # params
        ],
        out_specs=pl.BlockSpec((None, None, Hp_pad, Wp_pad),
                               lambda i: (0, 0, 0, 0)),
        compiler_params=pltpu.CompilerParams(dimension_semantics=("arbitrary",)),
    )(x_nchw, jnp.asarray(R), jnp.asarray(S), params)

    # single slice back to the valid window (no reshape needed)
    return out_pad[:, :, :Hp, :Wp]


def reference(x_nchw, w, b, gamma, beta, eps=1e-5):
    # Exact f32 element-wise reference (conv2d valid -> train-mode BN -> maxpool2).
    x2 = x_nchw[0, 0]
    y = (w[0, 0] * x2[:-1, :-1] + w[0, 1] * x2[:-1, 1:]
         + w[1, 0] * x2[1:, :-1] + w[1, 1] * x2[1:, 1:]) + b
    mean = jnp.mean(y)
    var = jnp.mean((y - mean) ** 2)                 # biased, as in BN training
    yb = (y - mean) / jnp.sqrt(var + eps) * gamma + beta
    Hc, Wc = y.shape
    Hp, Wp = Hc // 2, Wc // 2
    pooled = yb[:2 * Hp, :2 * Wp].reshape(Hp, 2, Wp, 2).max(axis=(1, 3))
    return pooled[None, None]


if __name__ == "__main__":
    key = jax.random.PRNGKey(0)
    kx, kw, kb = jax.random.split(key, 3)

    # input consistent with the module: (1, 1, 64, 128)
    x = jax.random.normal(kx, (1, 1, 64, 128), dtype=jnp.float32)

    # deterministic Conv2d(1,1,2) init (uniform in +-1/sqrt(fan_in), fan_in=4)
    bound = 1.0 / math.sqrt(1 * 2 * 2)
    w = jax.random.uniform(kw, (2, 2), jnp.float32, -bound, bound)
    b = jax.random.uniform(kb, (), jnp.float32, -bound, bound)
    gamma = jnp.float32(1.0)   # BatchNorm2d default affine init
    beta = jnp.float32(0.0)

    out = jax.jit(conv_bn_pool)(x, w, b, gamma, beta)
    out = jax.block_until_ready(out)

    ref = reference(x, w, b, gamma, beta)
    assert out.shape == (1, 1, 31, 63), out.shape
    err = float(jnp.max(jnp.abs(out - ref)))
    assert jnp.allclose(out, ref, atol=1e-4, rtol=1e-4), err

    print("KERNEL_OK")
</pallas_src>

<mosaic_0001>
module attributes {stable_mosaic.version = 11 : i64} {
  func.func @_conv_bn_pool_kernel(%arg0: i32, %arg1: memref<1x1x64x128xf32, #tpu.memory_space<vmem>>, %arg2: memref<32x64xf32, #tpu.memory_space<vmem>>, %arg3: memref<128x128xf32, #tpu.memory_space<vmem>>, %arg4: memref<7xf32, #tpu.memory_space<smem>>, %arg5: memref<1x1x32x128xf32, #tpu.memory_space<vmem>>) attributes {dimension_semantics = [#tpu.dimension_semantics<arbitrary>], iteration_bounds = array<i64: 1>, scalar_prefetch = 0 : i64, scratch_operands = 0 : i64, tpu.core_type = #tpu.core_type<tc>, window_params = [{pipeline_mode = #tpu.pipeline_mode<synchronous>, transform_indices = @transform_0, window_bounds = array<i64: 1, 1, 64, 128>}, {pipeline_mode = #tpu.pipeline_mode<synchronous>, transform_indices = @transform_1, window_bounds = array<i64: 32, 64>}, {pipeline_mode = #tpu.pipeline_mode<synchronous>, transform_indices = @transform_2, window_bounds = array<i64: 128, 128>}, {transform_indices = @transform_3, window_bounds = array<i64: 7>}, {pipeline_mode = #tpu.pipeline_mode<synchronous>, transform_indices = @transform_4, window_bounds = array<i64: 1, 1, 32, 128>}]} {
    %c0 = arith.constant 0 : index
    %c0_0 = arith.constant 0 : index
    %c0_1 = arith.constant 0 : index
    %c0_2 = arith.constant 0 : index
    %0 = vector.load %arg1[%c0, %c0_0, %c0_1, %c0_2] : memref<1x1x64x128xf32, #tpu.memory_space<vmem>>, vector<1x1x64x128xf32>
    %1 = vector.shape_cast %0 : vector<1x1x64x128xf32> to vector<64x128xf32>
    %c0_3 = arith.constant 0 : index
    %2 = memref.load %arg4[%c0_3] : memref<7xf32, #tpu.memory_space<smem>>
    %c1 = arith.constant 1 : index
    %3 = memref.load %arg4[%c1] : memref<7xf32, #tpu.memory_space<smem>>
    %c2 = arith.constant 2 : index
    %4 = memref.load %arg4[%c2] : memref<7xf32, #tpu.memory_space<smem>>
    %c3 = arith.constant 3 : index
    %5 = memref.load %arg4[%c3] : memref<7xf32, #tpu.memory_space<smem>>
    %c4 = arith.constant 4 : index
    %6 = memref.load %arg4[%c4] : memref<7xf32, #tpu.memory_space<smem>>
    %c5 = arith.constant 5 : index
    %7 = memref.load %arg4[%c5] : memref<7xf32, #tpu.memory_space<smem>>
    %c6 = arith.constant 6 : index
    %8 = memref.load %arg4[%c6] : memref<7xf32, #tpu.memory_space<smem>>
    %cst = arith.constant 0.000000e+00 : f32
    %9 = arith.cmpf oge, %6, %cst : f32
    %cst_4 = arith.constant 1.000000e+00 : f32
    %cst_5 = arith.constant -1.000000e+00 : f32
    %10 = arith.select %9, %cst_4, %cst_5 : f32
    %11 = arith.mulf %2, %10 : f32
    %12 = arith.mulf %3, %10 : f32
    %13 = arith.mulf %4, %10 : f32
    %14 = arith.mulf %5, %10 : f32
    %c127_i32 = arith.constant 127 : i32
    %15 = tpu.dynamic_rotate %1 by %c127_i32 dim 1 : vector<64x128xf32>, i32 -> vector<64x128xf32>
    %16 = vector.broadcast %11 : f32 to vector<64x128xf32>
    %17 = arith.mulf %16, %1 : vector<64x128xf32>
    %18 = vector.broadcast %12 : f32 to vector<64x128xf32>
    %19 = arith.mulf %18, %15 : vector<64x128xf32>
    %20 = arith.addf %17, %19 : vector<64x128xf32>
    %21 = vector.broadcast %13 : f32 to vector<64x128xf32>
    %22 = arith.mulf %21, %1 : vector<64x128xf32>
    %23 = vector.broadcast %14 : f32 to vector<64x128xf32>
    %24 = arith.mulf %23, %15 : vector<64x128xf32>
    %25 = arith.addf %22, %24 : vector<64x128xf32>
    %c63_i32 = arith.constant 63 : i32
    %26 = tpu.dynamic_rotate %25 by %c63_i32 dim 0 : vector<64x128xf32>, i32 -> vector<64x128xf32>
    %27 = arith.addf %20, %26 : vector<64x128xf32>
    %28 = tpu.iota {dimensions = array<i32: 0>} : vector<8x64xi32>
    %29 = tpu.iota {dimensions = array<i32: 1>} : vector<8x64xi32>
    %c0_i32 = arith.constant 0 : i32
    %30 = vector.broadcast %c0_i32 : i32 to vector<8x64xi32>
    %31 = arith.cmpi eq, %28, %30 : vector<8x64xi32>
    %c63_i32_6 = arith.constant 63 : i32
    %32 = vector.broadcast %c63_i32_6 : i32 to vector<8x64xi32>
    %33 = arith.cmpi slt, %29, %32 : vector<8x64xi32>
    %34 = arith.andi %31, %33 : vector<8x64xi1>
    %35 = arith.extui %34 : vector<8x64xi1> to vector<8x64xi32>
    %36 = arith.sitofp %35 : vector<8x64xi32> to vector<8x64xf32>
    %37 = tpu.iota {dimensions = array<i32: 1>} : vector<8x128xi32>
    %c127_i32_7 = arith.constant 127 : i32
    %38 = vector.broadcast %c127_i32_7 : i32 to vector<8x128xi32>
    %39 = arith.cmpi slt, %37, %38 : vector<8x128xi32>
    %40 = arith.extui %39 : vector<8x128xi1> to vector<8x128xi32>
    %41 = arith.sitofp %40 : vector<8x128xi32> to vector<8x128xf32>
    %cst_8 = arith.constant dense<0.000000e+00> : vector<8x128xf32>
    %42 = tpu.matmul %36, %27, %cst_8 {dimension_numbers = #tpu.dot_dimension_numbers<[1], [0], [0], [1], [0, 0, 1, 1], [], []>} : vector<8x64xf32>, vector<64x128xf32>, vector<8x128xf32> -> vector<8x128xf32>
    %43 = arith.mulf %27, %27 : vector<64x128xf32>
    %cst_9 = arith.constant dense<0.000000e+00> : vector<8x128xf32>
    %44 = tpu.matmul %36, %43, %cst_9 {dimension_numbers = #tpu.dot_dimension_numbers<[1], [0], [0], [1], [0, 0, 1, 1], [], []>} : vector<8x64xf32>, vector<64x128xf32>, vector<8x128xf32> -> vector<8x128xf32>
    %45 = arith.mulf %42, %41 : vector<8x128xf32>
    %46 = vector.shape_cast %45 : vector<8x128xf32> to vector<1x8x128xf32>
    %cst_10 = arith.constant dense<0.000000e+00> : vector<1xf32>
    %47 = vector.multi_reduction <add>, %46, %cst_10 [1, 2] : vector<1x8x128xf32> to vector<1xf32>
    %48 = vector.shape_cast %47 : vector<1xf32> to vector<1x1x1xf32>
    %49 = vector.extract %48[0, 0, 0] : f32 from vector<1x1x1xf32>
    %50 = vector.broadcast %49 : f32 to vector<1x1xf32>
    %51 = vector.extract %50[0, 0] : f32 from vector<1x1xf32>
    %52 = arith.mulf %44, %41 : vector<8x128xf32>
    %53 = vector.shape_cast %52 : vector<8x128xf32> to vector<1x8x128xf32>
    %cst_11 = arith.constant dense<0.000000e+00> : vector<1xf32>
    %54 = vector.multi_reduction <add>, %53, %cst_11 [1, 2] : vector<1x8x128xf32> to vector<1xf32>
    %55 = vector.shape_cast %54 : vector<1xf32> to vector<1x1x1xf32>
    %56 = vector.extract %55[0, 0, 0] : f32 from vector<1x1x1xf32>
    %57 = vector.broadcast %56 : f32 to vector<1x1xf32>
    %58 = vector.extract %57[0, 0] : f32 from vector<1x1xf32>
    %59 = arith.mulf %10, %51 : f32
    %cst_12 = arith.constant 1.24984377E-4 : f32
    %60 = arith.mulf %59, %cst_12 : f32
    %cst_13 = arith.constant 1.24984377E-4 : f32
    %61 = arith.mulf %58, %cst_13 : f32
    %62 = arith.mulf %60, %60 : f32
    %63 = arith.subf %61, %62 : f32
    %64 = arith.addf %63, %8 : f32
    %65 = math.rsqrt %64 : f32
    %66 = arith.mulf %6, %65 : f32
    %c127_i32_14 = arith.constant 127 : i32
    %67 = tpu.dynamic_rotate %27 by %c127_i32_14 dim 1 : vector<64x128xf32>, i32 -> vector<64x128xf32>
    %68 = arith.maximumf %27, %67 : vector<64x128xf32>
    %c63_i32_15 = arith.constant 63 : i32
    %69 = tpu.dynamic_rotate %68 by %c63_i32_15 dim 0 : vector<64x128xf32>, i32 -> vector<64x128xf32>
    %70 = arith.maximumf %68, %69 : vector<64x128xf32>
    %c0_16 = arith.constant 0 : index
    %c0_17 = arith.constant 0 : index
    %71 = vector.load %arg2[%c0_16, %c0_17] : memref<32x64xf32, #tpu.memory_space<vmem>>, vector<32x64xf32>
    %cst_18 = arith.constant dense<0.000000e+00> : vector<32x128xf32>
    %72 = tpu.matmul %71, %70, %cst_18 {dimension_numbers = #tpu.dot_dimension_numbers<[1], [0], [0], [1], [0, 0, 1, 1], [], []>} : vector<32x64xf32>, vector<64x128xf32>, vector<32x128xf32> -> vector<32x128xf32>
    %c0_19 = arith.constant 0 : index
    %c0_20 = arith.constant 0 : index
    %73 = vector.load %arg3[%c0_19, %c0_20] : memref<128x128xf32, #tpu.memory_space<vmem>>, vector<128x128xf32>
    %cst_21 = arith.constant dense<0.000000e+00> : vector<32x128xf32>
    %74 = tpu.matmul %72, %73, %cst_21 {dimension_numbers = #tpu.dot_dimension_numbers<[1], [0], [0], [1], [0, 0, 1, 1], [], []>} : vector<32x128xf32>, vector<128x128xf32>, vector<32x128xf32> -> vector<32x128xf32>
    %75 = arith.mulf %10, %66 : f32
    %76 = vector.broadcast %75 : f32 to vector<32x128xf32>
    %77 = arith.mulf %74, %76 : vector<32x128xf32>
    %78 = arith.mulf %60, %66 : f32
    %79 = arith.subf %7, %78 : f32
    %80 = vector.broadcast %79 : f32 to vector<32x128xf32>
    %81 = arith.addf %77, %80 : vector<32x128xf32>
    %c0_22 = arith.constant 0 : index
    %c0_23 = arith.constant 0 : index
    %c0_24 = arith.constant 0 : index
    %c0_25 = arith.constant 0 : index
    %82 = vector.load %arg5[%c0_22, %c0_23, %c0_24, %c0_25] : memref<1x1x32x128xf32, #tpu.memory_space<vmem>>, vector<1x1x32x128xf32>
    %83 = vector.shape_cast %82 : vector<1x1x32x128xf32> to vector<32x128xf32>
    %84 = vector.shape_cast %81 : vector<32x128xf32> to vector<1x1x32x128xf32>
    tpu.vector_store %arg5[%c0_22, %c0_23, %c0_24, %c0_25], %84 {strides = array<i32>} : memref<1x1x32x128xf32, #tpu.memory_space<vmem>>, vector<1x1x32x128xf32>,
    return
  }
  func.func @transform_0(%arg0: i32) -> (i32, i32, i32, i32) {
    %c0_i32 = arith.constant 0 : i32
    %c0_i32_0 = arith.constant 0 : i32
    %c0_i32_1 = arith.constant 0 : i32
    %c0_i32_2 = arith.constant 0 : i32
    %c0_i32_3 = arith.constant 0 : i32
    return %c0_i32, %c0_i32_0, %c0_i32_1, %c0_i32_2 : i32, i32, i32, i32
  }
  func.func @transform_1(%arg0: i32) -> (i32, i32) {
    %c0_i32 = arith.constant 0 : i32
    %c0_i32_0 = arith.constant 0 : i32
    %c0_i32_1 = arith.constant 0 : i32
    return %c0_i32, %c0_i32_0 : i32, i32
  }
  func.func @transform_2(%arg0: i32) -> (i32, i32) {
    %c0_i32 = arith.constant 0 : i32
    %c0_i32_0 = arith.constant 0 : i32
    %c0_i32_1 = arith.constant 0 : i32
    return %c0_i32, %c0_i32_0 : i32, i32
  }
  func.func @transform_3(%arg0: i32) -> i32 {
    %c0_i32 = arith.constant 0 : i32
    %c0_i32_0 = arith.constant 0 : i32
    return %c0_i32 : i32
  }
  func.func @transform_4(%arg0: i32) -> (i32, i32, i32, i32) {
    %c0_i32 = arith.constant 0 : i32
    %c0_i32_0 = arith.constant 0 : i32
    %c0_i32_1 = arith.constant 0 : i32
    %c0_i32_2 = arith.constant 0 : i32
    %c0_i32_3 = arith.constant 0 : i32
    return %c0_i32, %c0_i32_0, %c0_i32_1, %c0_i32_2 : i32, i32, i32, i32
  }
}

</mosaic_0001>

<llo_original>
// kernel: conv_bn_pool.1
$region0: #{conv_bn_pool.1}
  #allocation0 [shape = 'u32[]', space=smem, size = 0x4, offset = 0x4, fixed_abs, tag = 'smem constant byte address 0x4 - core index']
  #allocation1 [shape = 'u32[144,128]{1,0:T(1,128)}', space=vmem, size = 0x12000, scoped, tag = 'internal scratch']
  %s0 = inlined_call_operand.hbm [shape: f32[1,1,64,128], index: 0, kind: input, shape index: {}]
  %s1 = inlined_call_operand.vmem [shape: f32[32,64], index: 1, kind: input, shape index: {}]
  %s2 = inlined_call_operand.hbm [shape: f32[128,128], index: 2, kind: input, shape index: {}]
  %s3 = inlined_call_operand.vmem [shape: f32[7], index: 3, kind: input, shape index: {}]
  %s4 = inlined_call_operand.vmem [shape: f32[1,1,32,128], index: 4, kind: output, shape index: {}]
  %s5 = sld [smem:[#allocation0]]
  $region38: #{conv_bn_pool.1} parent=0
    _
  %s7 = ssub.s32 1, %s5
  %s8 = scalar_select 0, %s7, %s5
  $region1: #{conv_bn_pool.1} parent=0
    #allocation2 [shape = 'u8[32768]{0}', space=vmem, size = 0x8000, scoped, tag = 'input window, operand 0, single buffered']
    #allocation3 [shape = 's32[1]{0}', space=sflag, size = 0x4, scoped, tag = 'scoped memory for conv_bn_pool.1']
    #allocation4 [shape = 's32[1]{0}', space=sflag, size = 0x4, scoped, tag = 'scoped memory for conv_bn_pool.1']
    #allocation5 [shape = 'u8[65536]{0}', space=vmem, size = 0x10000, scoped, tag = 'input window, operand 2, single buffered']
    #allocation6 [shape = 's32[1]{0}', space=sflag, size = 0x4, scoped, tag = 'scoped memory for conv_bn_pool.1']
    #allocation7 [shape = 'u8[512]{0}', space=smem, size = 0x200, scoped, tag = 'input window, operand 3, single buffered']
    %9 = vsyncpa [#allocation3], 0
    %10 = vsyncpa [#allocation6], 0
    %11 = vsyncpa [#allocation4], 0
    // Predicated region
    $region2: #{conv_bn_pool.1} parent=1 // pred_check
      _
    $region3: #{conv_bn_pool.1} parent=1 // pred_check_branch
      %13 = sbr.rel (0) target = $region5
    $region4: #{conv_bn_pool.1} parent=1 // pred_region
      %s15 = ssub.s32 1024, 1024
      %16 = vsyncadd [#allocation3], %s15
      %s17 = sshll.u32 [#allocation2], 4
      %s18 = int_to_ptr.vmem [resolvable:$true] %s17
      %23 = dma.hbm_to_vmem [thread:$0]  %s0, 1024, %s18, [#allocation3], 128, 128, 8
    $region5: #{conv_bn_pool.1} parent=1 // pred_fallthru
      _
    // Predicated region
    $region6: #{conv_bn_pool.1} parent=1 // pred_check
      _
    $region7: #{conv_bn_pool.1} parent=1 // pred_check_branch
      %25 = sbr.rel (0) target = $region9
    $region8: #{conv_bn_pool.1} parent=1 // pred_region
      _
    $region9: #{conv_bn_pool.1} parent=1 // pred_fallthru
      _
    // Predicated region
    $region10: #{conv_bn_pool.1} parent=1 // pred_check
      _
    $region11: #{conv_bn_pool.1} parent=1 // pred_check_branch
      %27 = sbr.rel (0) target = $region13
    $region12: #{conv_bn_pool.1} parent=1 // pred_region
      %s29 = ssub.s32 2048, 2048
      %30 = vsyncadd [#allocation6], %s29
      %s31 = sshll.u32 [#allocation5], 4
      %s32 = int_to_ptr.vmem [resolvable:$true] %s31
      %37 = dma.hbm_to_vmem [thread:$0]  %s2, 2048, %s32, [#allocation6], 128, 128, 8
    $region13: #{conv_bn_pool.1} parent=1 // pred_fallthru
      _
    // Predicated region
    $region14: #{conv_bn_pool.1} parent=1 // pred_check
      _
    $region15: #{conv_bn_pool.1} parent=1 // pred_check_branch
      %39 = sbr.rel (0) target = $region17
    $region16: #{conv_bn_pool.1} parent=1 // pred_region
      %s41 = ssub.s32 16, 16
      %42 = vsyncadd [#allocation4], %s41
      %s44 = sshll.u32 %s3, 4
      %s45 = int_to_ptr.vmem [resolvable:$true] %s44
      %47 = dma.vmem_to_smem %s45, 16, [#allocation7], [#allocation4]
    $region17: #{conv_bn_pool.1} parent=1 // pred_fallthru
      _
    // Predicated region
    $region18: #{conv_bn_pool.1} parent=1 // pred_check
      _
    $region19: #{conv_bn_pool.1} parent=1 // pred_check_branch
      %49 = sbr.rel (0) target = $region21
    $region20: #{conv_bn_pool.1} parent=1 // pred_region
      %50 = dma.done [#allocation3], 1024
    $region21: #{conv_bn_pool.1} parent=1 // pred_fallthru
      _
    // Predicated region
    $region22: #{conv_bn_pool.1} parent=1 // pred_check
      _
    $region23: #{conv_bn_pool.1} parent=1 // pred_check_branch
      %52 = sbr.rel (0) target = $region25
    $region24: #{conv_bn_pool.1} parent=1 // pred_region
      %53 = dma.done [#allocation6], 2048
    $region25: #{conv_bn_pool.1} parent=1 // pred_fallthru
      _
    // Predicated region
    $region26: #{conv_bn_pool.1} parent=1 // pred_check
      _
    $region27: #{conv_bn_pool.1} parent=1 // pred_check_branch
      %55 = sbr.rel (0) target = $region29
    $region28: #{conv_bn_pool.1} parent=1 // pred_region
      %56 = dma.done [#allocation4], 16
    $region29: #{conv_bn_pool.1} parent=1 // pred_fallthru
      _
    %57 = sfence
    %v58 = vld [vmem:[#allocation2] sm:$0xff]
    %v59 = vld [vmem:[#allocation2 + $0x8] sm:$0xff]
    %v60 = vld [vmem:[#allocation2 + $0x10] sm:$0xff]
    %v61 = vld [vmem:[#allocation2 + $0x18] sm:$0xff]
    %v62 = vld [vmem:[#allocation2 + $0x20] sm:$0xff]
    %v63 = vld [vmem:[#allocation2 + $0x28] sm:$0xff]
    %v64 = vld [vmem:[#allocation2 + $0x30] sm:$0xff]
    %v65 = vld [vmem:[#allocation2 + $0x38] sm:$0xff]
    %s66 = sld [smem:[#allocation7]]
    %s67 = sld [smem:[#allocation7 + $0x1]]
    %s68 = sld [smem:[#allocation7 + $0x2]]
    %s69 = sld [smem:[#allocation7 + $0x3]]
    %s70 = sld [smem:[#allocation7 + $0x4]]
    %s71 = sld [smem:[#allocation7 + $0x5]]
    %s72 = sld [smem:[#allocation7 + $0x6]]
    %p73 = scmp.ge.f32.partialorder %s70, 0.0
    %s74 = scalar_select %p73, 1.0, -1.0
    %s75 = smul.f32 %s66, %s74
    %s76 = smul.f32 %s67, %s74
    %s77 = smul.f32 %s68, %s74
    %s78 = smul.f32 %s69, %s74
    %79 = vrot.lane.b32.xlu0 %v58, 127
    %v80 = vpop.permute.xlu0 %79
    %81 = vrot.lane.b32.xlu0 %v59, 127
    %v82 = vpop.permute.xlu0 %81
    %83 = vrot.lane.b32.xlu0 %v60, 127
    %v84 = vpop.permute.xlu0 %83
    %85 = vrot.lane.b32.xlu0 %v61, 127
    %v86 = vpop.permute.xlu0 %85
    %87 = vrot.lane.b32.xlu0 %v62, 127
    %v88 = vpop.permute.xlu0 %87
    %89 = vrot.lane.b32.xlu0 %v63, 127
    %v90 = vpop.permute.xlu0 %89
    %91 = vrot.lane.b32.xlu0 %v64, 127
    %v92 = vpop.permute.xlu0 %91
    %93 = vrot.lane.b32.xlu0 %v65, 127
    %v94 = vpop.permute.xlu0 %93
    %v95 = vstv %s75
    %v96 = vmul.f32 %v95, %v58
    %v97 = vmul.f32 %v95, %v59
    %v98 = vmul.f32 %v95, %v60
    %v99 = vmul.f32 %v95, %v61
    %v100 = vmul.f32 %v95, %v62
    %v101 = vmul.f32 %v95, %v63
    %v102 = vmul.f32 %v95, %v64
    %v103 = vmul.f32 %v95, %v65
    %v104 = vstv %s76
    %v105 = vmul.f32 %v104, %v80
    %v106 = vmul.f32 %v104, %v82
    %v107 = vmul.f32 %v104, %v84
    %v108 = vmul.f32 %v104, %v86
    %v109 = vmul.f32 %v104, %v88
    %v110 = vmul.f32 %v104, %v90
    %v111 = vmul.f32 %v104, %v92
    %v112 = vmul.f32 %v104, %v94
    %v113 = vadd.f32 %v96, %v105
    %v114 = vadd.f32 %v97, %v106
    %v115 = vadd.f32 %v98, %v107
    %v116 = vadd.f32 %v99, %v108
    %v117 = vadd.f32 %v100, %v109
    %v118 = vadd.f32 %v101, %v110
    %v119 = vadd.f32 %v102, %v111
    %v120 = vadd.f32 %v103, %v112
    %v121 = vstv %s77
    %v122 = vmul.f32 %v121, %v58
    %v123 = vmul.f32 %v121, %v59
    %v124 = vmul.f32 %v121, %v60
    %v125 = vmul.f32 %v121, %v61
    %v126 = vmul.f32 %v121, %v62
    %v127 = vmul.f32 %v121, %v63
    %v128 = vmul.f32 %v121, %v64
    %v129 = vmul.f32 %v121, %v65
    %v130 = vstv %s78
    %v131 = vmul.f32 %v130, %v80
    %v132 = vmul.f32 %v130, %v82
    %v133 = vmul.f32 %v130, %v84
    %v134 = vmul.f32 %v130, %v86
    %v135 = vmul.f32 %v130, %v88
    %v136 = vmul.f32 %v130, %v90
    %v137 = vmul.f32 %v130, %v92
    %v138 = vmul.f32 %v130, %v94
    %v139 = vadd.f32 %v122, %v131
    %v140 = vadd.f32 %v123, %v132
    %v141 = vadd.f32 %v124, %v133
    %v142 = vadd.f32 %v125, %v134
    %v143 = vadd.f32 %v126, %v135
    %v144 = vadd.f32 %v127, %v136
    %v145 = vadd.f32 %v128, %v137
    %v146 = vadd.f32 %v129, %v138
    %v147 = vrot.slane %v139, 1
    %v148 = vrot.slane %v140, 1
    %v149 = vrot.slane %v141, 1
    %v150 = vrot.slane %v142, 1
    %v151 = vrot.slane %v143, 1
    %v152 = vrot.slane %v144, 1
    %v153 = vrot.slane %v145, 1
    %v154 = vrot.slane %v146, 1
    %v155 = vlaneseq
    %v156 = vshrl.u32 %v155, 7
    %vm157 = vcmp.lt.s32.totalorder %v156, 7
    %v158 = vsel %vm157, %v153, %v154
    %v159 = vsel %vm157, %v152, %v153
    %v160 = vsel %vm157, %v151, %v152
    %v161 = vsel %vm157, %v150, %v151
    %v162 = vsel %vm157, %v149, %v150
    %v163 = vsel %vm157, %v148, %v149
    %v164 = vsel %vm157, %v147, %v148
    %v165 = vsel %vm157, %v154, %v147
    %v166 = vadd.f32 %v113, %v164
    %v167 = vadd.f32 %v114, %v163
    %v168 = vadd.f32 %v115, %v162
    %v169 = vadd.f32 %v116, %v161
    %v170 = vadd.f32 %v117, %v160
    %v171 = vadd.f32 %v118, %v159
    %v172 = vadd.f32 %v119, %v158
    %v173 = vadd.f32 %v120, %v165
    %v174 = vlaneseq
    %v175 = vand.u32 %v174, 127
    %vm176 = vcmp.eq.s32.totalorder %v156, 0
    %vm177 = vcmp.lt.s32.totalorder %v175, 63
    %vm178 = vmand %vm176, %vm177
    %v179 = vsel %vm178, 1, 0
    %v180 = vcvt.s32.f32 %v179
    %vm181 = vcmp.lt.s32.totalorder %v175, 127
    %v182 = vsel %vm181, 1, 0
    %v183 = vcvt.s32.f32 %v182
    %vm184 = vcmask 523264
    %v186 = vsel %vm184, %v180, 0
    %188 = vmatprep.subr.mxu0 0.0
    %189 = vmatpush1.msra.mxu0 %v166
    %190 = vmatprep.subr.mxu0 0.0
    %191 = vmatpush1.msra.mxu0 %v167
    %192 = vmatprep.subr.mxu0 0.0
    %193 = vmatpush1.msra.mxu0 %v168
    %194 = vmatprep.subr.mxu0 0.0
    %195 = vmatpush1.msra.mxu0 %v169
    %196 = vmatprep.subr.mxu0 0.0
    %197 = vmatpush1.msra.mxu0 %v170
    %198 = vmatprep.subr.mxu0 0.0
    %199 = vmatpush1.msra.mxu0 %v171
    %200 = vmatprep.subr.mxu0 0.0
    %201 = vmatpush1.msra.mxu0 %v172
    %202 = vmatprep.subr.mxu0 0.0
    %203 = vmatpush1.msra.mxu0 %v173
    %204 = vmatprep.subr.mxu0 0.0
    %205 = vmatpush1.msra.mxu0 0.0
    %206 = vmatprep.subr.mxu0 0.0
    %207 = vmatpush1.msra.mxu0 0.0
    %208 = vmatprep.subr.mxu0 0.0
    %209 = vmatpush1.msra.mxu0 0.0
    %210 = vmatprep.subr.mxu0 0.0
    %211 = vmatpush1.msra.mxu0 0.0
    %212 = vmatprep.subr.mxu0 0.0
    %213 = vmatpush1.msra.mxu0 0.0
    %214 = vmatprep.subr.mxu0 0.0
    %215 = vmatpush1.msra.mxu0 0.0
    %216 = vmatprep.subr.mxu0 0.0
    %217 = vmatpush1.msra.mxu0 0.0
    %218 = vmatprep.subr.mxu0 0.0
    %219 = vmatpush1.msra.mxu0 0.0
    %220 = vmatprep.subr.mxu0 0.0
    %221 = vmatpush1.msra.mxu0 0.0
    %222 = vmatprep.subr.mxu0 0.0
    %223 = vmatpush1.msra.mxu0 0.0
    %224 = vmatprep.subr.mxu0 0.0
    %225 = vmatpush1.msra.mxu0 0.0
    %226 = vmatprep.subr.mxu0 0.0
    %227 = vmatpush1.msra.mxu0 0.0
    %228 = vmatprep.subr.mxu0 0.0
    %229 = vmatpush1.msra.mxu0 0.0
    %230 = vmatprep.subr.mxu0 0.0
    %231 = vmatpush1.msra.mxu0 0.0
    %232 = vmatprep.subr.mxu0 0.0
    %233 = vmatpush1.msra.mxu0 0.0
    %234 = vmatprep.subr.mxu0 0.0
    %235 = vmatpush1.msra.mxu0 0.0
    %236 = vmatprep.subr.mxu0 0.0
    %237 = vmatpush1.msra.mxu0 0.0
    %238 = vmatprep.subr.mxu0 0.0
    %239 = vmatpush1.msra.mxu0 0.0
    %240 = vmatprep.subr.mxu0 0.0
    %241 = vmatpush1.msra.mxu0 0.0
    %242 = vmatprep.subr.mxu0 0.0
    %243 = vmatpush1.msra.mxu0 0.0
    %244 = vmatprep.subr.mxu0 0.0
    %245 = vmatpush1.msra.mxu0 0.0
    %246 = vmatprep.subr.mxu0 0.0
    %247 = vmatpush1.msra.mxu0 0.0
    %248 = vmatprep.subr.mxu0 0.0
    %249 = vmatpush1.msra.mxu0 0.0
    %250 = vmatprep.subr.mxu0 0.0
    %251 = vmatpush1.msra.mxu0 0.0
    %252 = vmatprep.mubr.f32.mxu0 0.0
    %253 = vmatmul.mubr.f32.gmra.mrb[0].mxu0 %v186
    %v254 = vpop.f32.mrb[0].mxu0
    %v255 = vadd.f32 0.0, %v254
    %v256 = vpop.f32.mrb[0].mxu0
    %257 = vdwg.mxu0
    %v258 = vmul.f32 %v166, %v166
    %v259 = vmul.f32 %v167, %v167
    %v260 = vmul.f32 %v168, %v168
    %v261 = vmul.f32 %v169, %v169
    %v262 = vmul.f32 %v170, %v170
    %v263 = vmul.f32 %v171, %v171
    %v264 = vmul.f32 %v172, %v172
    %v265 = vmul.f32 %v173, %v173
    %266 = vmatprep.subr.mxu0 0.0
    %267 = vmatpush1.msra.mxu0 %v258
    %268 = vmatprep.subr.mxu0 0.0
    %269 = vmatpush1.msra.mxu0 %v259
    %270 = vmatprep.subr.mxu0 0.0
    %271 = vmatpush1.msra.mxu0 %v260
    %272 = vmatprep.subr.mxu0 0.0
    %273 = vmatpush1.msra.mxu0 %v261
    %274 = vmatprep.subr.mxu0 0.0
    %275 = vmatpush1.msra.mxu0 %v262
    %276 = vmatprep.subr.mxu0 0.0
    %277 = vmatpush1.msra.mxu0 %v263
    %278 = vmatprep.subr.mxu0 0.0
    %279 = vmatpush1.msra.mxu0 %v264
    %280 = vmatprep.subr.mxu0 0.0
    %281 = vmatpush1.msra.mxu0 %v265
    %282 = vmatprep.subr.mxu0 0.0
    %283 = vmatpush1.msra.mxu0 0.0
    %284 = vmatprep.subr.mxu0 0.0
    %285 = vmatpush1.msra.mxu0 0.0
    %286 = vmatprep.subr.mxu0 0.0
    %287 = vmatpush1.msra.mxu0 0.0
    %288 = vmatprep.subr.mxu0 0.0
    %289 = vmatpush1.msra.mxu0 0.0
    %290 = vmatprep.subr.mxu0 0.0
    %291 = vmatpush1.msra.mxu0 0.0
    %292 = vmatprep.subr.mxu0 0.0
    %293 = vmatpush1.msra.mxu0 0.0
    %294 = vmatprep.subr.mxu0 0.0
    %295 = vmatpush1.msra.mxu0 0.0
    %296 = vmatprep.subr.mxu0 0.0
    %297 = vmatpush1.msra.mxu0 0.0
    %298 = vmatprep.subr.mxu0 0.0
    %299 = vmatpush1.msra.mxu0 0.0
    %300 = vmatprep.subr.mxu0 0.0
    %301 = vmatpush1.msra.mxu0 0.0
    %302 = vmatprep.subr.mxu0 0.0
    %303 = vmatpush1.msra.mxu0 0.0
    %304 = vmatprep.subr.mxu0 0.0
    %305 = vmatpush1.msra.mxu0 0.0
    %306 = vmatprep.subr.mxu0 0.0
    %307 = vmatpush1.msra.mxu0 0.0
    %308 = vmatprep.subr.mxu0 0.0
    %309 = vmatpush1.msra.mxu0 0.0
    %310 = vmatprep.subr.mxu0 0.0
    %311 = vmatpush1.msra.mxu0 0.0
    %312 = vmatprep.subr.mxu0 0.0
    %313 = vmatpush1.msra.mxu0 0.0
    %314 = vmatprep.subr.mxu0 0.0
    %315 = vmatpush1.msra.mxu0 0.0
    %316 = vmatprep.subr.mxu0 0.0
    %317 = vmatpush1.msra.mxu0 0.0
    %318 = vmatprep.subr.mxu0 0.0
    %319 = vmatpush1.msra.mxu0 0.0
    %320 = vmatprep.subr.mxu0 0.0
    %321 = vmatpush1.msra.mxu0 0.0
    %322 = vmatprep.subr.mxu0 0.0
    %323 = vmatpush1.msra.mxu0 0.0
    %324 = vmatprep.subr.mxu0 0.0
    %325 = vmatpush1.msra.mxu0 0.0
    %326 = vmatprep.subr.mxu0 0.0
    %327 = vmatpush1.msra.mxu0 0.0
    %328 = vmatprep.subr.mxu0 0.0
    %329 = vmatpush1.msra.mxu0 0.0
    %330 = vmatprep.mubr.f32.mxu0 0.0
    %331 = vmatmul.mubr.f32.gmra.mrb[0].mxu0 %v186
    %v332 = vpop.f32.mrb[0].mxu0
    %v333 = vadd.f32 0.0, %v332
    %v334 = vpop.f32.mrb[0].mxu0
    %335 = vdwg.mxu0
    %v336 = vmul.f32 %v255, %v183
    %337 = vadd.xlane.f32.xlu0 %v336
    %v338 = vpop.xlane.xlu0 %337
    %v339 = vrot.slane %v338, 4
    %v340 = vadd.f32 %v338, %v339
    %v341 = vrot.slane %v340, 2
    %v342 = vadd.f32 %v340, %v341
    %v343 = vrot.slane %v342, 1
    %v344 = vadd.f32 %v342, %v343
    %s345 = vtos %v344
    %v346 = vmul.f32 %v333, %v183
    %347 = vadd.xlane.f32.xlu0 %v346
    %v348 = vpop.xlane.xlu0 %347
    %v349 = vrot.slane %v348, 4
    %v350 = vadd.f32 %v348, %v349
    %v351 = vrot.slane %v350, 2
    %v352 = vadd.f32 %v350, %v351
    %v353 = vrot.slane %v352, 1
    %v354 = vadd.f32 %v352, %v353
    %s355 = vtos %v354
    %s356 = smul.f32 %s74, %s345
    %s357 = smul.f32 %s356, 0.00012498438
    %s358 = smul.f32 %s355, 0.00012498438
    %s359 = smul.f32 %s357, %s357
    %s360 = ssub.f32 %s358, %s359
    %s361 = sadd.f32 %s360, %s72
    %v362 = vstv %s361
    %v363 = vrsqrt.pop %v362
    %s364 = vtos %v363
    %s365 = smul.f32 %s70, %s364
    %366 = vrot.lane.b32.xlu0 %v166, 127
    %v367 = vpop.permute.xlu0 %366
    %368 = vrot.lane.b32.xlu0 %v167, 127
    %v369 = vpop.permute.xlu0 %368
    %370 = vrot.lane.b32.xlu0 %v168, 127
    %v371 = vpop.permute.xlu0 %370
    %372 = vrot.lane.b32.xlu0 %v169, 127
    %v373 = vpop.permute.xlu0 %372
    %374 = vrot.lane.b32.xlu0 %v170, 127
    %v375 = vpop.permute.xlu0 %374
    %376 = vrot.lane.b32.xlu0 %v171, 127
    %v377 = vpop.permute.xlu0 %376
    %378 = vrot.lane.b32.xlu0 %v172, 127
    %v379 = vpop.permute.xlu0 %378
    %380 = vrot.lane.b32.xlu0 %v173, 127
    %v381 = vpop.permute.xlu0 %380
    %v382 = vmax.f32 %v166, %v367
    %v383 = vmax.f32 %v167, %v369
    %v384 = vmax.f32 %v168, %v371
    %v385 = vmax.f32 %v169, %v373
    %v386 = vmax.f32 %v170, %v375
    %v387 = vmax.f32 %v171, %v377
    %v388 = vmax.f32 %v172, %v379
    %v389 = vmax.f32 %v173, %v381
    %v390 = vrot.slane %v382, 1
    %v391 = vrot.slane %v383, 1
    %v392 = vrot.slane %v384, 1
    %v393 = vrot.slane %v385, 1
    %v394 = vrot.slane %v386, 1
    %v395 = vrot.slane %v387, 1
    %v396 = vrot.slane %v388, 1
    %v397 = vrot.slane %v389, 1
    %v398 = vsel %vm157, %v396, %v397
    %v399 = vsel %vm157, %v395, %v396
    %v400 = vsel %vm157, %v394, %v395
    %v401 = vsel %vm157, %v393, %v394
    %v402 = vsel %vm157, %v392, %v393
    %v403 = vsel %vm157, %v391, %v392
    %v404 = vsel %vm157, %v390, %v391
    %v405 = vsel %vm157, %v397, %v390
    %v406 = vmax.f32 %v382, %v404
    %v407 = vmax.f32 %v383, %v403
    %v408 = vmax.f32 %v384, %v402
    %v409 = vmax.f32 %v385, %v401
    %v410 = vmax.f32 %v386, %v400
    %v411 = vmax.f32 %v387, %v399
    %v412 = vmax.f32 %v388, %v398
    %v413 = vmax.f32 %v389, %v405
    %v414 = vld [vmem:[%s1] sm:$0xff]
    %v415 = vld [vmem:[%s1 + $0x8] sm:$0xff]
    %v416 = vld [vmem:[%s1 + $0x10] sm:$0xff]
    %v417 = vld [vmem:[%s1 + $0x18] sm:$0xff]
    %v419 = vsel %vm184, %v414, 0
    %v422 = vsel %vm184, %v415, 0
    %v425 = vsel %vm184, %v416, 0
    %v428 = vsel %vm184, %v417, 0
    %430 = vmatprep.subr.mxu0 0.0
    %431 = vmatpush1.msra.mxu0 %v406
    %432 = vmatprep.subr.mxu0 0.0
    %433 = vmatpush1.msra.mxu0 %v407
    %434 = vmatprep.subr.mxu0 0.0
    %435 = vmatpush1.msra.mxu0 %v408
    %436 = vmatprep.subr.mxu0 0.0
    %437 = vmatpush1.msra.mxu0 %v409
    %438 = vmatprep.subr.mxu0 0.0
    %439 = vmatpush1.msra.mxu0 %v410
    %440 = vmatprep.subr.mxu0 0.0
    %441 = vmatpush1.msra.mxu0 %v411
    %442 = vmatprep.subr.mxu0 0.0
    %443 = vmatpush1.msra.mxu0 %v412
    %444 = vmatprep.subr.mxu0 0.0
    %445 = vmatpush1.msra.mxu0 %v413
    %446 = vmatprep.subr.mxu0 0.0
    %447 = vmatpush1.msra.mxu0 0.0
    %448 = vmatprep.subr.mxu0 0.0
    %449 = vmatpush1.msra.mxu0 0.0
    %450 = vmatprep.subr.mxu0 0.0
    %451 = vmatpush1.msra.mxu0 0.0
    %452 = vmatprep.subr.mxu0 0.0
    %453 = vmatpush1.msra.mxu0 0.0
    %454 = vmatprep.subr.mxu0 0.0
    %455 = vmatpush1.msra.mxu0 0.0
    %456 = vmatprep.subr.mxu0 0.0
    %457 = vmatpush1.msra.mxu0 0.0
    %458 = vmatprep.subr.mxu0 0.0
    %459 = vmatpush1.msra.mxu0 0.0
    %460 = vmatprep.subr.mxu0 0.0
    %461 = vmatpush1.msra.mxu0 0.0
    %462 = vmatprep.subr.mxu0 0.0
    %463 = vmatpush1.msra.mxu0 0.0
    %464 = vmatprep.subr.mxu0 0.0
    %465 = vmatpush1.msra.mxu0 0.0
    %466 = vmatprep.subr.mxu0 0.0
    %467 = vmatpush1.msra.mxu0 0.0
    %468 = vmatprep.subr.mxu0 0.0
    %469 = vmatpush1.msra.mxu0 0.0
    %470 = vmatprep.subr.mxu0 0.0
    %471 = vmatpush1.msra.mxu0 0.0
    %472 = vmatprep.subr.mxu0 0.0
    %473 = vmatpush1.msra.mxu0 0.0
    %474 = vmatprep.subr.mxu0 0.0
    %475 = vmatpush1.msra.mxu0 0.0
    %476 = vmatprep.subr.mxu0 0.0
    %477 = vmatpush1.msra.mxu0 0.0
    %478 = vmatprep.subr.mxu0 0.0
    %479 = vmatpush1.msra.mxu0 0.0
    %480 = vmatprep.subr.mxu0 0.0
    %481 = vmatpush1.msra.mxu0 0.0
    %482 = vmatprep.subr.mxu0 0.0
    %483 = vmatpush1.msra.mxu0 0.0
    %484 = vmatprep.subr.mxu0 0.0
    %485 = vmatpush1.msra.mxu0 0.0
    %486 = vmatprep.subr.mxu0 0.0
    %487 = vmatpush1.msra.mxu0 0.0
    %488 = vmatprep.subr.mxu0 0.0
    %489 = vmatpush1.msra.mxu0 0.0
    %490 = vmatprep.subr.mxu0 0.0
    %491 = vmatpush1.msra.mxu0 0.0
    %492 = vmatprep.subr.mxu0 0.0
    %493 = vmatpush1.msra.mxu0 0.0
    %494 = vmatprep.mubr.f32.mxu0 0.0
    %495 = vmatmul.mubr.f32.gmra.mrb[0].mxu0 %v419
    %v496 = vpop.f32.mrb[0].mxu0
    %v497 = vadd.f32 0.0, %v496
    %v498 = vpop.f32.mrb[0].mxu0
    %499 = vmatprep.mubr.f32.mxu0 0.0
    %500 = vmatmul.mubr.f32.gmra.mrb[0].mxu0 %v422
    %v501 = vpop.f32.mrb[0].mxu0
    %v502 = vadd.f32 0.0, %v501
    %v503 = vpop.f32.mrb[0].mxu0
    %504 = vmatprep.mubr.f32.mxu0 0.0
    %505 = vmatmul.mubr.f32.gmra.mrb[0].mxu0 %v425
    %v506 = vpop.f32.mrb[0].mxu0
    %v507 = vadd.f32 0.0, %v506
    %v508 = vpop.f32.mrb[0].mxu0
    %509 = vmatprep.mubr.f32.mxu0 0.0
    %510 = vmatmul.mubr.f32.gmra.mrb[0].mxu0 %v428
    %v511 = vpop.f32.mrb[0].mxu0
    %v512 = vadd.f32 0.0, %v511
    %v513 = vpop.f32.mrb[0].mxu0
    %514 = vdwg.mxu0
    %v515 = vld [vmem:[#allocation5] sm:$0xff]
    %v516 = vld [vmem:[#allocation5 + $0x8] sm:$0xff]
    %v517 = vld [vmem:[#allocation5 + $0x10] sm:$0xff]
    %v518 = vld [vmem:[#allocation5 + $0x18] sm:$0xff]
    %v519 = vld [vmem:[#allocation5 + $0x20] sm:$0xff]
    %v520 = vld [vmem:[#allocation5 + $0x28] sm:$0xff]
    %v521 = vld [vmem:[#allocation5 + $0x30] sm:$0xff]
    %v522 = vld [vmem:[#allocation5 + $0x38] sm:$0xff]
    %v523 = vld [vmem:[#allocation5 + $0x40] sm:$0xff]
    %v524 = vld [vmem:[#allocation5 + $0x48] sm:$0xff]
    %v525 = vld [vmem:[#allocation5 + $0x50] sm:$0xff]
    %v526 = vld [vmem:[#allocation5 + $0x58] sm:$0xff]
    %v527 = vld [vmem:[#allocation5 + $0x60] sm:$0xff]
    %v528 = vld [vmem:[#allocation5 + $0x68] sm:$0xff]
    %v529 = vld [vmem:[#allocation5 + $0x70] sm:$0xff]
    %v530 = vld [vmem:[#allocation5 + $0x78] sm:$0xff]
    %531 = vmatprep.subr.mxu0 0.0
    %532 = vmatpush1.msra.mxu0 %v515
    %533 = vmatprep.subr.mxu0 0.0
    %534 = vmatpush1.msra.mxu0 %v516
    %535 = vmatprep.subr.mxu0 0.0
    %536 = vmatpush1.msra.mxu0 %v517
    %537 = vmatprep.subr.mxu0 0.0
    %538 = vmatpush1.msra.mxu0 %v518
    %539 = vmatprep.subr.mxu0 0.0
    %540 = vmatpush1.msra.mxu0 %v519
    %541 = vmatprep.subr.mxu0 0.0
    %542 = vmatpush1.msra.mxu0 %v520
    %543 = vmatprep.subr.mxu0 0.0
    %544 = vmatpush1.msra.mxu0 %v521
    %545 = vmatprep.subr.mxu0 0.0
    %546 = vmatpush1.msra.mxu0 %v522
    %547 = vmatprep.subr.mxu0 0.0
    %548 = vmatpush1.msra.mxu0 %v523
    %549 = vmatprep.subr.mxu0 0.0
    %550 = vmatpush1.msra.mxu0 %v524
    %551 = vmatprep.subr.mxu0 0.0
    %552 = vmatpush1.msra.mxu0 %v525
    %553 = vmatprep.subr.mxu0 0.0
    %554 = vmatpush1.msra.mxu0 %v526
    %555 = vmatprep.subr.mxu0 0.0
    %556 = vmatpush1.msra.mxu0 %v527
    %557 = vmatprep.subr.mxu0 0.0
    %558 = vmatpush1.msra.mxu0 %v528
    %559 = vmatprep.subr.mxu0 0.0
    %560 = vmatpush1.msra.mxu0 %v529
    %561 = vmatprep.subr.mxu0 0.0
    %562 = vmatpush1.msra.mxu0 %v530
    %563 = vmatprep.subr.mxu0 0.0
    %564 = vmatpush1.msra.mxu0 0.0
    %565 = vmatprep.subr.mxu0 0.0
    %566 = vmatpush1.msra.mxu0 0.0
    %567 = vmatprep.subr.mxu0 0.0
    %568 = vmatpush1.msra.mxu0 0.0
    %569 = vmatprep.subr.mxu0 0.0
    %570 = vmatpush1.msra.mxu0 0.0
    %571 = vmatprep.subr.mxu0 0.0
    %572 = vmatpush1.msra.mxu0 0.0
    %573 = vmatprep.subr.mxu0 0.0
    %574 = vmatpush1.msra.mxu0 0.0
    %575 = vmatprep.subr.mxu0 0.0
    %576 = vmatpush1.msra.mxu0 0.0
    %577 = vmatprep.subr.mxu0 0.0
    %578 = vmatpush1.msra.mxu0 0.0
    %579 = vmatprep.subr.mxu0 0.0
    %580 = vmatpush1.msra.mxu0 0.0
    %581 = vmatprep.subr.mxu0 0.0
    %582 = vmatpush1.msra.mxu0 0.0
    %583 = vmatprep.subr.mxu0 0.0
    %584 = vmatpush1.msra.mxu0 0.0
    %585 = vmatprep.subr.mxu0 0.0
    %586 = vmatpush1.msra.mxu0 0.0
    %587 = vmatprep.subr.mxu0 0.0
    %588 = vmatpush1.msra.mxu0 0.0
    %589 = vmatprep.subr.mxu0 0.0
    %590 = vmatpush1.msra.mxu0 0.0
    %591 = vmatprep.subr.mxu0 0.0
    %592 = vmatpush1.msra.mxu0 0.0
    %593 = vmatprep.subr.mxu0 0.0
    %594 = vmatpush1.msra.mxu0 0.0
    %595 = vmatprep.mubr.f32.mxu0 0.0
    %596 = vmatmul.mubr.f32.gmra.mrb[0].mxu0 %v497
    %v597 = vpop.f32.mrb[0].mxu0
    %v598 = vadd.f32 0.0, %v597
    %v599 = vpop.f32.mrb[0].mxu0
    %600 = vmatprep.mubr.f32.mxu0 0.0
    %601 = vmatmul.mubr.f32.gmra.mrb[0].mxu0 %v502
    %v602 = vpop.f32.mrb[0].mxu0
    %v603 = vadd.f32 0.0, %v602
    %v604 = vpop.f32.mrb[0].mxu0
    %605 = vmatprep.mubr.f32.mxu0 0.0
    %606 = vmatmul.mubr.f32.gmra.mrb[0].mxu0 %v507
    %v607 = vpop.f32.mrb[0].mxu0
    %v608 = vadd.f32 0.0, %v607
    %v609 = vpop.f32.mrb[0].mxu0
    %610 = vmatprep.mubr.f32.mxu0 0.0
    %611 = vmatmul.mubr.f32.gmra.mrb[0].mxu0 %v512
    %v612 = vpop.f32.mrb[0].mxu0
    %v613 = vadd.f32 0.0, %v612
    %v614 = vpop.f32.mrb[0].mxu0
    %615 = vdwg.mxu0
    %s616 = smul.f32 %s74, %s365
    %v617 = vstv %s616
    %v618 = vmul.f32 %v598, %v617
    %v619 = vmul.f32 %v603, %v617
    %v620 = vmul.f32 %v608, %v617
    %v621 = vmul.f32 %v613, %v617
    %s622 = smul.f32 %s357, %s365
    %s623 = ssub.f32 %s71, %s622
    %v624 = vstv %s623
    %v625 = vadd.f32 %v618, %v624
    %v626 = vadd.f32 %v619, %v624
    %v627 = vadd.f32 %v620, %v624
    %v628 = vadd.f32 %v621, %v624
    %629 = vst [vmem:[%s4] sm:$0xff] %v625
    %630 = vst [vmem:[%s4 + $0x8] sm:$0xff] %v626
    %631 = vst [vmem:[%s4 + $0x10] sm:$0xff] %v627
    %632 = vst [vmem:[%s4 + $0x18] sm:$0xff] %v628
    // Predicated region
    $region30: #{conv_bn_pool.1} parent=1 // pred_check
      _
    $region31: #{conv_bn_pool.1} parent=1 // pred_check_branch
      %634 = sbr.rel (0) target = $region33
    $region32: #{conv_bn_pool.1} parent=1 // pred_region
      _
    $region33: #{conv_bn_pool.1} parent=1 // pred_fallthru
      _
    // Predicated region
    $region34: #{conv_bn_pool.1} parent=1 // pred_check
      _
    $region35: #{conv_bn_pool.1} parent=1 // pred_check_branch
      %636 = sbr.rel (0) target = $region37
    $region36: #{conv_bn_pool.1} parent=1 // pred_region
      _
    $region37: #{conv_bn_pool.1} parent=1 // pred_fallthru
      _
    %637 = vsyncpa [#allocation3], 1
    %638 = vsyncpa [#allocation6], 1
    %639 = vsyncpa [#allocation4], 1

</llo_original>
